<compile_context>
chip_gen: v5e
topology: v5e:2x2
jax: 0.10.0
libtpu: 0.0.40
codegen_flags: <defaults>
</compile_context>

<pallas_src>
import numpy as np
import jax
import jax.numpy as jnp
from jax.experimental import pallas as pl
from jax.experimental.pallas import tpu as pltpu


def _make_triplet_kernel(margin, rep, m_valid):
    margin = float(margin)

    def kernel(x1a_ref, x1p_ref, x2a_ref, x1n_ref, out_ref, acc_ref):
        i = pl.program_id(0)
        nq_pad = x1a_ref.shape[1]
        tn = x1n_ref.shape[1]

        @pl.when(i == 0)
        def _init():
            acc_ref[...] = jnp.zeros_like(acc_ref)

        a = x1a_ref[...].astype(jnp.float32)      # (dim_pad, nq_pad)  resident
        p = x1p_ref[...].astype(jnp.float32)      # (dim_pad, nq_pad)  resident
        n = x1n_ref[...].astype(jnp.float32)      # (dim_pad, tn)      streamed

        # One-hot selection matrix E[q, j] = 1 iff global negative column
        # (i*tn + j) belongs to query q, i.e. q*rep <= col < (q+1)*rep.
        # (No integer division needed; padded queries / columns never match a
        #  valid (q, col) pair or are masked below.)
        col = jax.lax.broadcasted_iota(jnp.int32, (nq_pad, tn), 1) + i * tn
        lo = jax.lax.broadcasted_iota(jnp.int32, (nq_pad, tn), 0) * rep
        sel = jnp.logical_and(col >= lo, col < lo + rep)
        e = jnp.where(sel, 1.0, 0.0).astype(jnp.float32)          # (nq_pad, tn)

        # Exact per-column broadcast of the anchor / positive vectors
        # (each column of `e` has at most a single 1 -> pure selection).
        a_exp = jnp.dot(a, e, preferred_element_type=jnp.float32)  # (dim_pad, tn)
        p_exp = jnp.dot(p, e, preferred_element_type=jnp.float32)  # (dim_pad, tn)

        dist_pos = jnp.sum((a_exp - p_exp) ** 2, axis=0, keepdims=True)  # (1, tn)
        dist_neg = jnp.sum((a_exp - n) ** 2, axis=0, keepdims=True)      # (1, tn)

        hinge = jnp.maximum(dist_pos - dist_neg + margin, 0.0)
        lane = jax.lax.broadcasted_iota(jnp.int32, (1, tn), 1) + i * tn
        acc_ref[...] += jnp.where(lane < m_valid, hinge, 0.0)

        @pl.when(i == pl.num_programs(0) - 1)
        def _finalize():
            # loss_second_token uses the same x1-based distances as
            # loss_first_token in the reference module, so the alpha-weighted
            # sum alpha*L + (1-alpha)*L folds to L.
            hinge_sum = jnp.sum(acc_ref[...], keepdims=True)              # (1, 1)

            # Cosine term: first anchor column of x1 vs first anchor column of x2.
            av = a[:, 0:1]                                                # (dim_pad, 1)
            bv = x2a_ref[...].astype(jnp.float32)                         # (dim_pad, 1)
            dot = jnp.sum(av * bv, keepdims=True)                         # (1, 1)
            na2 = jnp.sum(av * av, keepdims=True)
            nb2 = jnp.sum(bv * bv, keepdims=True)
            # 1 / max(|a|*|b|, 1e-6)  ==  rsqrt(max(|a|^2 * |b|^2, 1e-12))
            inv = jax.lax.rsqrt(jnp.maximum(na2 * nb2, 1e-12))
            cos_loss = jnp.maximum(dot * inv - 0.9, 0.0)

            out_ref[...] = hinge_sum + cos_loss

    return kernel


def _pad2(x, rows, cols):
    pr, pc = rows - x.shape[0], cols - x.shape[1]
    if pr == 0 and pc == 0:
        return x
    return jnp.pad(x, ((0, pr), (0, pc)))


def triplet_loss_two_inputs(x1, x2, label, margin=0.1, alpha=0.5):
    """Pallas-backed equivalent of TripletLossTwoInputs.forward.

    `label` must be a concrete (host) array: the column selection it drives is
    static shape glue, exactly as in the PyTorch module.
    """
    del alpha  # loss_second == loss_first -> the alpha weighting folds away.
    label = np.asarray(label)
    dim, n = x1.shape

    anchor_idx = np.where(label == -1)[0]
    pos_idx = np.where(label == 1)[0]
    neg_idx = np.where(label == 0)[0]

    nq = int(anchor_idx.size)
    S = n // nq
    rep = S - 2                      # negatives per query
    M = nq * rep                     # total (anchor, pos, neg) triplets
    assert rep >= 1 and int(neg_idx.size) == M and int(pos_idx.size) == nq

    # Compact inputs (no repeat-interleave, native dtype through the DMA).
    x1a = x1[:, anchor_idx]                                # (dim, nq)
    x1p = x1[:, pos_idx]                                   # (dim, nq)
    x1n = x1[:, neg_idx]                                   # (dim, M), original order
    x2a0 = x2[:, anchor_idx[0]:anchor_idx[0] + 1]          # (dim, 1) — only column used

    # Alignment: sublane-pad dim and the selection K-dim; lane-pad the token axis.
    dim_pad = -(-dim // 8) * 8
    nq_pad = -(-nq // 8) * 8
    itemsize = jnp.dtype(x1.dtype).itemsize
    tn = min(512, -(-M // 128) * 128)                      # lane-aligned token tile
    # Keep the double-buffered negative tile small vs. scoped VMEM (v5e 16 MiB,
    # v7x 32 MiB default) — shrink tile width for very large feature dims.
    while tn > 128 and 2 * tn * dim_pad * itemsize > 4 * 1024 * 1024:
        tn //= 2
    m_pad = -(-M // tn) * tn
    grid = (m_pad // tn,)

    x1a = _pad2(x1a, dim_pad, nq_pad)
    x1p = _pad2(x1p, dim_pad, nq_pad)
    x1n = _pad2(x1n, dim_pad, m_pad)                       # zero-padded tail, masked in-kernel
    x2a0 = _pad2(x2a0, dim_pad, 1)

    kernel = _make_triplet_kernel(margin, rep, M)

    out = pl.pallas_call(
        kernel,
        out_shape=jax.ShapeDtypeStruct((1, 1), jnp.float32),
        grid_spec=pltpu.PrefetchScalarGridSpec(
            num_scalar_prefetch=0,
            grid=grid,
            in_specs=[
                pl.BlockSpec((dim_pad, nq_pad), lambda i: (0, 0)),   # anchors (resident)
                pl.BlockSpec((dim_pad, nq_pad), lambda i: (0, 0)),   # positives (resident)
                pl.BlockSpec((dim_pad, 1), lambda i: (0, 0)),        # x2 first anchor
                pl.BlockSpec((dim_pad, tn), lambda i: (0, i)),       # negatives (streamed)
            ],
            out_specs=pl.BlockSpec((1, 1), lambda i: (0, 0)),
            scratch_shapes=[pltpu.VMEM((1, tn), jnp.float32)],
        ),
        compiler_params=pltpu.CompilerParams(
            # Token axis carries a shared accumulator -> "arbitrary".
            # TODO(synk): on v7x, emit per-tile partial sums instead so this axis
            # can be "parallel" and shard across the two TensorCores.
            dimension_semantics=("arbitrary",),
            vmem_limit_bytes=32 * 1024 * 1024,
        ),
    )(x1a, x1p, x2a0, x1n)
    return out[0, 0]


def _reference(x1, x2, label, margin=0.1, alpha=0.5):
    """Pure-JAX reference mirroring the PyTorch forward (for validation)."""
    label = np.asarray(label)
    anchor_idx = np.where(label == -1)[0]
    pos_idx = np.where(label == 1)[0]
    neg_idx = np.where(label == 0)[0]
    nq = anchor_idx.size
    S = x1.shape[1] // nq
    rep = S - 2
    x1a = jnp.repeat(x1[:, anchor_idx], rep, axis=1)
    x1p = jnp.repeat(x1[:, pos_idx], rep, axis=1)
    x1n = x1[:, neg_idx]
    x2a = jnp.repeat(x2[:, anchor_idx], rep, axis=1)
    dp = jnp.sum((x1a - x1p) ** 2, axis=0)
    dn = jnp.sum((x1a - x1n) ** 2, axis=0)
    l1 = jnp.sum(jnp.maximum(dp - dn + margin, 0.0))
    l2 = jnp.sum(jnp.maximum(dp - dn + margin, 0.0))
    a, b = x1a[:, 0], x2a[:, 0]
    cos = jnp.dot(a, b) / jnp.maximum(
        jnp.linalg.norm(a) * jnp.linalg.norm(b), 1e-6)
    return l1 * alpha + l2 * (1 - alpha) + jnp.maximum(cos - 0.9, 0.0)


if __name__ == "__main__":
    # Small deterministic example: dim=32 features, nq=2 queries, S=8 tokens
    # per query -> N=16 tokens. Per-query labels: [-1, 1, 0,0,0,0,0,0].
    dim, nq, S = 32, 2, 8
    N = nq * S
    label = np.array(([-1, 1] + [0] * (S - 2)) * nq, dtype=np.int32)

    key = jax.random.PRNGKey(0)
    k1, k2 = jax.random.split(key)
    x1 = jax.random.normal(k1, (dim, N), dtype=jnp.float32)
    x2 = jax.random.normal(k2, (dim, N), dtype=jnp.float32)

    out = triplet_loss_two_inputs(x1, x2, label, margin=0.1, alpha=0.5)
    out = jax.block_until_ready(out)

    ref = _reference(x1, x2, label, margin=0.1, alpha=0.5)
    np.testing.assert_allclose(np.asarray(out), np.asarray(ref),
                               rtol=1e-4, atol=1e-5)
    print("KERNEL_OK")
</pallas_src>

<mosaic_0001>
module attributes {stable_mosaic.version = 11 : i64} {
  func.func @kernel(%arg0: i32, %arg1: memref<32x8xf32, #tpu.memory_space<vmem>>, %arg2: memref<32x8xf32, #tpu.memory_space<vmem>>, %arg3: memref<32x1xf32, #tpu.memory_space<vmem>>, %arg4: memref<32x128xf32, #tpu.memory_space<vmem>>, %arg5: memref<1x1xf32, #tpu.memory_space<vmem>>, %arg6: memref<1x128xf32, #tpu.memory_space<vmem>>) attributes {dimension_semantics = [#tpu.dimension_semantics<arbitrary>], iteration_bounds = array<i64: 1>, scalar_prefetch = 0 : i64, scratch_operands = 1 : i64, tpu.core_type = #tpu.core_type<tc>, window_params = [{pipeline_mode = #tpu.pipeline_mode<synchronous>, transform_indices = @transform_0, window_bounds = array<i64: 32, 8>}, {pipeline_mode = #tpu.pipeline_mode<synchronous>, transform_indices = @transform_1, window_bounds = array<i64: 32, 8>}, {pipeline_mode = #tpu.pipeline_mode<synchronous>, transform_indices = @transform_2, window_bounds = array<i64: 32, 1>}, {transform_indices = @transform_3, window_bounds = array<i64: 32, 128>}, {pipeline_mode = #tpu.pipeline_mode<synchronous>, transform_indices = @transform_4, window_bounds = array<i64: 1, 1>}]} {
    %c0_i32 = arith.constant 0 : i32
    %0 = arith.cmpi eq, %arg0, %c0_i32 : i32
    %1 = arith.extui %0 : i1 to i32
    %c0_i32_0 = arith.constant 0 : i32
    %2 = arith.cmpi ne, %1, %c0_i32_0 : i32
    scf.if %2 {
      %cst_22 = arith.constant 0.000000e+00 : f32
      %50 = vector.broadcast %cst_22 : f32 to vector<1x128xf32>
      %c0_23 = arith.constant 0 : index
      %c0_24 = arith.constant 0 : index
      %51 = vector.load %arg6[%c0_23, %c0_24] : memref<1x128xf32, #tpu.memory_space<vmem>>, vector<1x128xf32>
      tpu.vector_store %arg6[%c0_23, %c0_24], %50 {strides = array<i32>} : memref<1x128xf32, #tpu.memory_space<vmem>>, vector<1x128xf32>,
    } else {
    }
    %c0 = arith.constant 0 : index
    %c0_1 = arith.constant 0 : index
    %3 = vector.load %arg1[%c0, %c0_1] : memref<32x8xf32, #tpu.memory_space<vmem>>, vector<32x8xf32>
    %c0_2 = arith.constant 0 : index
    %c0_3 = arith.constant 0 : index
    %4 = vector.load %arg2[%c0_2, %c0_3] : memref<32x8xf32, #tpu.memory_space<vmem>>, vector<32x8xf32>
    %c0_4 = arith.constant 0 : index
    %c0_5 = arith.constant 0 : index
    %5 = vector.load %arg4[%c0_4, %c0_5] : memref<32x128xf32, #tpu.memory_space<vmem>>, vector<32x128xf32>
    %6 = tpu.iota {dimensions = array<i32: 1>} : vector<8x128xi32>
    %c128_i32 = arith.constant 128 : i32
    %7 = arith.muli %arg0, %c128_i32 : i32
    %8 = vector.broadcast %7 : i32 to vector<8x128xi32>
    %9 = arith.addi %6, %8 : vector<8x128xi32>
    %10 = tpu.iota {dimensions = array<i32: 0>} : vector<8x128xi32>
    %c6_i32 = arith.constant 6 : i32
    %11 = vector.broadcast %c6_i32 : i32 to vector<8x128xi32>
    %12 = arith.muli %10, %11 : vector<8x128xi32>
    %13 = arith.cmpi sge, %9, %12 : vector<8x128xi32>
    %c6_i32_6 = arith.constant 6 : i32
    %14 = vector.broadcast %c6_i32_6 : i32 to vector<8x128xi32>
    %15 = arith.addi %12, %14 : vector<8x128xi32>
    %16 = arith.cmpi slt, %9, %15 : vector<8x128xi32>
    %17 = arith.andi %13, %16 : vector<8x128xi1>
    %cst = arith.constant 1.000000e+00 : f32
    %cst_7 = arith.constant 0.000000e+00 : f32
    %18 = vector.broadcast %cst : f32 to vector<8x128xf32>
    %19 = vector.broadcast %cst_7 : f32 to vector<8x128xf32>
    %20 = arith.select %17, %18, %19 : vector<8x128xi1>, vector<8x128xf32>
    %cst_8 = arith.constant dense<0.000000e+00> : vector<32x128xf32>
    %21 = tpu.matmul %3, %20, %cst_8 {dimension_numbers = #tpu.dot_dimension_numbers<[1], [0], [0], [1], [0, 0, 1, 1], [], []>} : vector<32x8xf32>, vector<8x128xf32>, vector<32x128xf32> -> vector<32x128xf32>
    %cst_9 = arith.constant dense<0.000000e+00> : vector<32x128xf32>
    %22 = tpu.matmul %4, %20, %cst_9 {dimension_numbers = #tpu.dot_dimension_numbers<[1], [0], [0], [1], [0, 0, 1, 1], [], []>} : vector<32x8xf32>, vector<8x128xf32>, vector<32x128xf32> -> vector<32x128xf32>
    %23 = arith.subf %21, %22 : vector<32x128xf32>
    %24 = arith.mulf %23, %23 : vector<32x128xf32>
    %cst_10 = arith.constant dense<0.000000e+00> : vector<128xf32>
    %25 = vector.multi_reduction <add>, %24, %cst_10 [0] : vector<32x128xf32> to vector<128xf32>
    %26 = vector.shape_cast %25 : vector<128xf32> to vector<1x128xf32>
    %27 = arith.subf %21, %5 : vector<32x128xf32>
    %28 = arith.mulf %27, %27 : vector<32x128xf32>
    %cst_11 = arith.constant dense<0.000000e+00> : vector<128xf32>
    %29 = vector.multi_reduction <add>, %28, %cst_11 [0] : vector<32x128xf32> to vector<128xf32>
    %30 = vector.shape_cast %29 : vector<128xf32> to vector<1x128xf32>
    %31 = arith.subf %26, %30 : vector<1x128xf32>
    %cst_12 = arith.constant 1.000000e-01 : f32
    %32 = vector.broadcast %cst_12 : f32 to vector<1x128xf32>
    %33 = arith.addf %31, %32 : vector<1x128xf32>
    %cst_13 = arith.constant 0.000000e+00 : f32
    %34 = vector.broadcast %cst_13 : f32 to vector<1x128xf32>
    %35 = arith.maximumf %33, %34 : vector<1x128xf32>
    %36 = tpu.iota {dimensions = array<i32: 1>} : vector<1x128xi32>
    %c128_i32_14 = arith.constant 128 : i32
    %37 = arith.muli %arg0, %c128_i32_14 : i32
    %38 = vector.broadcast %37 : i32 to vector<1x128xi32>
    %39 = arith.addi %36, %38 : vector<1x128xi32>
    %c0_15 = arith.constant 0 : index
    %c0_16 = arith.constant 0 : index
    %40 = vector.load %arg6[%c0_15, %c0_16] : memref<1x128xf32, #tpu.memory_space<vmem>>, vector<1x128xf32>
    %c12_i32 = arith.constant 12 : i32
    %41 = vector.broadcast %c12_i32 : i32 to vector<1x128xi32>
    %42 = arith.cmpi slt, %39, %41 : vector<1x128xi32>
    %cst_17 = arith.constant 0.000000e+00 : f32
    %43 = vector.broadcast %cst_17 : f32 to vector<1x128xf32>
    %44 = arith.select %42, %35, %43 : vector<1x128xi1>, vector<1x128xf32>
    %45 = arith.addf %40, %44 : vector<1x128xf32>
    %c0_18 = arith.constant 0 : index
    %c0_19 = arith.constant 0 : index
    %46 = vector.load %arg6[%c0_18, %c0_19] : memref<1x128xf32, #tpu.memory_space<vmem>>, vector<1x128xf32>
    tpu.vector_store %arg6[%c0_18, %c0_19], %45 {strides = array<i32>} : memref<1x128xf32, #tpu.memory_space<vmem>>, vector<1x128xf32>,
    %c0_i32_20 = arith.constant 0 : i32
    %47 = arith.cmpi eq, %arg0, %c0_i32_20 : i32
    %48 = arith.extui %47 : i1 to i32
    %c0_i32_21 = arith.constant 0 : i32
    %49 = arith.cmpi ne, %48, %c0_i32_21 : i32
    scf.if %49 {
      %c0_22 = arith.constant 0 : index
      %c0_23 = arith.constant 0 : index
      %50 = vector.load %arg6[%c0_22, %c0_23] : memref<1x128xf32, #tpu.memory_space<vmem>>, vector<1x128xf32>
      %51 = vector.shape_cast %50 : vector<1x128xf32> to vector<1x1x128xf32>
      %cst_24 = arith.constant dense<0.000000e+00> : vector<1xf32>
      %52 = vector.multi_reduction <add>, %51, %cst_24 [1, 2] : vector<1x1x128xf32> to vector<1xf32>
      %53 = vector.shape_cast %52 : vector<1xf32> to vector<1x1x1xf32>
      %54 = vector.extract %53[0, 0, 0] : f32 from vector<1x1x1xf32>
      %55 = vector.broadcast %54 : f32 to vector<1x1xf32>
      %56 = vector.extract_strided_slice %3 {offsets = [0, 0], sizes = [32, 1], strides = [1, 1]} : vector<32x8xf32> to vector<32x1xf32>
      %c0_25 = arith.constant 0 : index
      %c0_26 = arith.constant 0 : index
      %57 = vector.load %arg3[%c0_25, %c0_26] : memref<32x1xf32, #tpu.memory_space<vmem>>, vector<32x1xf32>
      %58 = arith.mulf %56, %57 : vector<32x1xf32>
      %59 = vector.shape_cast %58 : vector<32x1xf32> to vector<1x32x1xf32>
      %cst_27 = arith.constant dense<0.000000e+00> : vector<1xf32>
      %60 = vector.multi_reduction <add>, %59, %cst_27 [1, 2] : vector<1x32x1xf32> to vector<1xf32>
      %61 = vector.shape_cast %60 : vector<1xf32> to vector<1x1x1xf32>
      %62 = vector.extract %61[0, 0, 0] : f32 from vector<1x1x1xf32>
      %63 = vector.broadcast %62 : f32 to vector<1x1xf32>
      %64 = arith.mulf %56, %56 : vector<32x1xf32>
      %65 = vector.shape_cast %64 : vector<32x1xf32> to vector<1x32x1xf32>
      %cst_28 = arith.constant dense<0.000000e+00> : vector<1xf32>
      %66 = vector.multi_reduction <add>, %65, %cst_28 [1, 2] : vector<1x32x1xf32> to vector<1xf32>
      %67 = vector.shape_cast %66 : vector<1xf32> to vector<1x1x1xf32>
      %68 = vector.extract %67[0, 0, 0] : f32 from vector<1x1x1xf32>
      %69 = vector.broadcast %68 : f32 to vector<1x1xf32>
      %70 = arith.mulf %57, %57 : vector<32x1xf32>
      %71 = vector.shape_cast %70 : vector<32x1xf32> to vector<1x32x1xf32>
      %cst_29 = arith.constant dense<0.000000e+00> : vector<1xf32>
      %72 = vector.multi_reduction <add>, %71, %cst_29 [1, 2] : vector<1x32x1xf32> to vector<1xf32>
      %73 = vector.shape_cast %72 : vector<1xf32> to vector<1x1x1xf32>
      %74 = vector.extract %73[0, 0, 0] : f32 from vector<1x1x1xf32>
      %75 = vector.broadcast %74 : f32 to vector<1x1xf32>
      %76 = arith.mulf %69, %75 : vector<1x1xf32>
      %cst_30 = arith.constant 9.99999996E-13 : f32
      %77 = vector.broadcast %cst_30 : f32 to vector<1x1xf32>
      %78 = arith.maximumf %76, %77 : vector<1x1xf32>
      %79 = math.rsqrt %78 : vector<1x1xf32>
      %80 = arith.mulf %63, %79 : vector<1x1xf32>
      %cst_31 = arith.constant 0.899999976 : f32
      %81 = vector.broadcast %cst_31 : f32 to vector<1x1xf32>
      %82 = arith.subf %80, %81 : vector<1x1xf32>
      %cst_32 = arith.constant 0.000000e+00 : f32
      %83 = vector.broadcast %cst_32 : f32 to vector<1x1xf32>
      %84 = arith.maximumf %82, %83 : vector<1x1xf32>
      %85 = arith.addf %55, %84 : vector<1x1xf32>
      %c0_33 = arith.constant 0 : index
      %c0_34 = arith.constant 0 : index
      %86 = vector.load %arg5[%c0_33, %c0_34] : memref<1x1xf32, #tpu.memory_space<vmem>>, vector<1x1xf32>
      tpu.vector_store %arg5[%c0_33, %c0_34], %85 {strides = array<i32>} : memref<1x1xf32, #tpu.memory_space<vmem>>, vector<1x1xf32>,
    } else {
    }
    return
  }
  func.func @transform_0(%arg0: i32) -> (i32, i32) {
    %c0_i32 = arith.constant 0 : i32
    %c0_i32_0 = arith.constant 0 : i32
    %c0_i32_1 = arith.constant 0 : i32
    return %c0_i32, %c0_i32_0 : i32, i32
  }
  func.func @transform_1(%arg0: i32) -> (i32, i32) {
    %c0_i32 = arith.constant 0 : i32
    %c0_i32_0 = arith.constant 0 : i32
    %c0_i32_1 = arith.constant 0 : i32
    return %c0_i32, %c0_i32_0 : i32, i32
  }
  func.func @transform_2(%arg0: i32) -> (i32, i32) {
    %c0_i32 = arith.constant 0 : i32
    %c0_i32_0 = arith.constant 0 : i32
    %c0_i32_1 = arith.constant 0 : i32
    return %c0_i32, %c0_i32_0 : i32, i32
  }
  func.func @transform_3(%arg0: i32) -> (i32, i32) {
    %c0_i32 = arith.constant 0 : i32
    %c0_i32_0 = arith.constant 0 : i32
    return %c0_i32, %arg0 : i32, i32
  }
  func.func @transform_4(%arg0: i32) -> (i32, i32) {
    %c0_i32 = arith.constant 0 : i32
    %c0_i32_0 = arith.constant 0 : i32
    %c0_i32_1 = arith.constant 0 : i32
    return %c0_i32, %c0_i32_0 : i32, i32
  }
}

</mosaic_0001>

<llo_original>
// kernel: tpu_custom_call.1
$region0: #{tpu_custom_call.1}
  #allocation0 [shape = 'u32[]', space=smem, size = 0x4, offset = 0x4, fixed_abs, tag = 'smem constant byte address 0x4 - core index']
  #allocation1 [shape = 'u32[72,128]{1,0:T(1,128)}', space=vmem, size = 0x9000, scoped, tag = 'internal scratch']
  #allocation2 [shape = 'f32[1,128]{1,0:T(1,128)}', space=vmem, size = 0x200, scoped, tag = 'scratch operand']
  %s0 = inlined_call_operand.vmem [shape: f32[32,8], index: 0, kind: input, shape index: {}]
  %s1 = inlined_call_operand.vmem [shape: f32[32,8], index: 1, kind: input, shape index: {}]
  %s2 = inlined_call_operand.vmem [shape: f32[32,1], index: 2, kind: input, shape index: {}]
  %s3 = inlined_call_operand.vmem [shape: f32[32,128], index: 3, kind: input, shape index: {}]
  %s4 = inlined_call_operand.hbm [shape: f32[1,1], index: 4, kind: output, shape index: {}]
  %s5 = sld [smem:[#allocation0]]
  $region34: #{tpu_custom_call.1} parent=0
    _
  %s7 = ssub.s32 1, %s5
  %s8 = scalar_select 0, %s7, %s5
  $region1: #{tpu_custom_call.1} parent=0
    #allocation3 [shape = 'u8[512]{0}', space=vmem, size = 0x400, scoped, tag = 'output window, operand 0, single buffered']
    #allocation4 [shape = 's32[1]{0}', space=sflag, size = 0x4, scoped, tag = 'scoped memory for tpu_custom_call.1']
    %9 = vsyncpa [#allocation4], 0
    // Predicated region
    $region2: #{tpu_custom_call.1} parent=1 // pred_check
      _
    $region3: #{tpu_custom_call.1} parent=1 // pred_check_branch
      %11 = sbr.rel (0) target = $region5
    $region4: #{tpu_custom_call.1} parent=1 // pred_region
      _
    $region5: #{tpu_custom_call.1} parent=1 // pred_fallthru
      _
    // Predicated region
    $region6: #{tpu_custom_call.1} parent=1 // pred_check
      _
    $region7: #{tpu_custom_call.1} parent=1 // pred_check_branch
      %13 = sbr.rel (0) target = $region9
    $region8: #{tpu_custom_call.1} parent=1 // pred_region
      _
    $region9: #{tpu_custom_call.1} parent=1 // pred_fallthru
      _
    // Predicated region
    $region10: #{tpu_custom_call.1} parent=1 // pred_check
      _
    $region11: #{tpu_custom_call.1} parent=1 // pred_check_branch
      %15 = sbr.rel (0) target = $region13
    $region12: #{tpu_custom_call.1} parent=1 // pred_region
      _
    $region13: #{tpu_custom_call.1} parent=1 // pred_fallthru
      _
    // Predicated region
    $region14: #{tpu_custom_call.1} parent=1 // pred_check
      _
    $region15: #{tpu_custom_call.1} parent=1 // pred_check_branch
      %17 = sbr.rel (0) target = $region17
    $region16: #{tpu_custom_call.1} parent=1 // pred_region
      _
    $region17: #{tpu_custom_call.1} parent=1 // pred_fallthru
      _
    %p18 = scmp.eq.s32.totalorder 0, 0
    // Predicated region
    $region18: #{tpu_custom_call.1} parent=1 // pred_check
      %p19 = pneg %p18
    $region19: #{tpu_custom_call.1} parent=1 // pred_check_branch
      %21 = sbr.rel (%p19) target = $region21
    $region20: #{tpu_custom_call.1} parent=1 // pred_region
      %22 = vst [vmem:[#allocation2] sm:$0x1] 0.0
    $region21: #{tpu_custom_call.1} parent=1 // pred_fallthru
      _
    %v23 = vld [vmem:[%s0] sm:$0xff]
    %v24 = vld [vmem:[%s0 + $0x8] sm:$0xff]
    %v25 = vld [vmem:[%s0 + $0x10] sm:$0xff]
    %v26 = vld [vmem:[%s0 + $0x18] sm:$0xff]
    %v27 = vld [vmem:[%s1] sm:$0xff]
    %v28 = vld [vmem:[%s1 + $0x8] sm:$0xff]
    %v29 = vld [vmem:[%s1 + $0x10] sm:$0xff]
    %v30 = vld [vmem:[%s1 + $0x18] sm:$0xff]
    %v31 = vld [vmem:[%s3] sm:$0xff]
    %v32 = vld [vmem:[%s3 + $0x8] sm:$0xff]
    %v33 = vld [vmem:[%s3 + $0x10] sm:$0xff]
    %v34 = vld [vmem:[%s3 + $0x18] sm:$0xff]
    %v35 = vlaneseq
    %v36 = vand.u32 %v35, 127
    %s37 = smul.u32 0, 128
    %v38 = vstv %s37
    %v39 = vadd.s32 %v36, %v38
    %v40 = vlaneseq
    %v41 = vshrl.u32 %v40, 7
    %v42 = vmul.u32 %v41, 6
    %vm43 = vcmp.ge.s32.totalorder %v39, %v42
    %v44 = vadd.s32 %v42, 6
    %vm45 = vcmp.lt.s32.totalorder %v39, %v44
    %vm46 = vmand %vm43, %vm45
    %v47 = vsel %vm46, 1.0, 0.0
    %vm48 = vcmask 64512
    %v50 = vsel %vm48, %v23, 0
    %v53 = vsel %vm48, %v24, 0
    %v56 = vsel %vm48, %v25, 0
    %v59 = vsel %vm48, %v26, 0
    %61 = vmatpush.msra.mxu0 0.0
    %62 = vmatpush.msra.mxu0 0.0
    %63 = vmatpush.msra.mxu0 0.0
    %64 = vmatpush.msra.mxu0 0.0
    %65 = vmatpush.msra.mxu0 0.0
    %66 = vmatpush.msra.mxu0 0.0
    %67 = vmatpush.msra.mxu0 0.0
    %68 = vmatpush.msra.mxu0 0.0
    %69 = vmatpush.msra.mxu0 0.0
    %70 = vmatpush.msra.mxu0 0.0
    %71 = vmatpush.msra.mxu0 0.0
    %72 = vmatpush.msra.mxu0 0.0
    %73 = vmatpush.msra.mxu0 0.0
    %74 = vmatpush.msra.mxu0 0.0
    %75 = vmatpush.msra.mxu0 0.0
    %76 = vmatpush.msra.mxu0 %v47
    %77 = vmatmul.f32.gmra.mxu0 %v50
    %v78 = vpop.f32.mrf.mxu0
    %v79 = vadd.f32 0.0, %v78
    %80 = vmatmul.f32.gmra.mxu0 %v53
    %v81 = vpop.f32.mrf.mxu0
    %v82 = vadd.f32 0.0, %v81
    %83 = vmatmul.f32.gmra.mxu0 %v56
    %v84 = vpop.f32.mrf.mxu0
    %v85 = vadd.f32 0.0, %v84
    %86 = vmatmul.f32.gmra.mxu0 %v59
    %v87 = vpop.f32.mrf.mxu0
    %v88 = vadd.f32 0.0, %v87
    %89 = vdwg.mxu0
    %v91 = vsel %vm48, %v27, 0
    %v94 = vsel %vm48, %v28, 0
    %v97 = vsel %vm48, %v29, 0
    %v100 = vsel %vm48, %v30, 0
    %102 = vmatpush.msra.mxu0 0.0
    %103 = vmatpush.msra.mxu0 0.0
    %104 = vmatpush.msra.mxu0 0.0
    %105 = vmatpush.msra.mxu0 0.0
    %106 = vmatpush.msra.mxu0 0.0
    %107 = vmatpush.msra.mxu0 0.0
    %108 = vmatpush.msra.mxu0 0.0
    %109 = vmatpush.msra.mxu0 0.0
    %110 = vmatpush.msra.mxu0 0.0
    %111 = vmatpush.msra.mxu0 0.0
    %112 = vmatpush.msra.mxu0 0.0
    %113 = vmatpush.msra.mxu0 0.0
    %114 = vmatpush.msra.mxu0 0.0
    %115 = vmatpush.msra.mxu0 0.0
    %116 = vmatpush.msra.mxu0 0.0
    %117 = vmatpush.msra.mxu0 %v47
    %118 = vmatmul.f32.gmra.mxu0 %v91
    %v119 = vpop.f32.mrf.mxu0
    %v120 = vadd.f32 0.0, %v119
    %121 = vmatmul.f32.gmra.mxu0 %v94
    %v122 = vpop.f32.mrf.mxu0
    %v123 = vadd.f32 0.0, %v122
    %124 = vmatmul.f32.gmra.mxu0 %v97
    %v125 = vpop.f32.mrf.mxu0
    %v126 = vadd.f32 0.0, %v125
    %127 = vmatmul.f32.gmra.mxu0 %v100
    %v128 = vpop.f32.mrf.mxu0
    %v129 = vadd.f32 0.0, %v128
    %130 = vdwg.mxu0
    %v131 = vsub.f32 %v79, %v120
    %v132 = vsub.f32 %v82, %v123
    %v133 = vsub.f32 %v85, %v126
    %v134 = vsub.f32 %v88, %v129
    %v135 = vmul.f32 %v131, %v131
    %v136 = vmul.f32 %v132, %v132
    %v137 = vmul.f32 %v133, %v133
    %v138 = vmul.f32 %v134, %v134
    %v139 = vadd.f32 %v135, %v136
    %v140 = vadd.f32 %v139, %v137
    %v141 = vadd.f32 %v140, %v138
    %v142 = vrot.slane %v141, 4
    %v143 = vadd.f32 %v141, %v142
    %v144 = vrot.slane %v143, 2
    %v145 = vadd.f32 %v143, %v144
    %v146 = vrot.slane %v145, 1
    %v147 = vadd.f32 %v145, %v146
    %v148 = vsub.f32 %v79, %v31
    %v149 = vsub.f32 %v82, %v32
    %v150 = vsub.f32 %v85, %v33
    %v151 = vsub.f32 %v88, %v34
    %v152 = vmul.f32 %v148, %v148
    %v153 = vmul.f32 %v149, %v149
    %v154 = vmul.f32 %v150, %v150
    %v155 = vmul.f32 %v151, %v151
    %v156 = vadd.f32 %v152, %v153
    %v157 = vadd.f32 %v156, %v154
    %v158 = vadd.f32 %v157, %v155
    %v159 = vrot.slane %v158, 4
    %v160 = vadd.f32 %v158, %v159
    %v161 = vrot.slane %v160, 2
    %v162 = vadd.f32 %v160, %v161
    %v163 = vrot.slane %v162, 1
    %v164 = vadd.f32 %v162, %v163
    %v165 = vsub.f32 %v147, %v164
    %v166 = vadd.f32 %v165, 0.1
    %v167 = vmax.f32 %v166, 0.0
    %v168 = vld [vmem:[#allocation2] sm:$0x1]
    %vm169 = vcmp.lt.s32.totalorder %v39, 12
    %v170 = vsel %vm169, %v167, 0.0
    %v171 = vadd.f32 %v168, %v170
    %172 = vst [vmem:[#allocation2] sm:$0x1] %v171
    // Predicated region
    $region22: #{tpu_custom_call.1} parent=1 // pred_check
      %p173 = pneg %p18
    $region23: #{tpu_custom_call.1} parent=1 // pred_check_branch
      %175 = sbr.rel (%p173) target = $region25
    $region24: #{tpu_custom_call.1} parent=1 // pred_region
      %v176 = vld [vmem:[#allocation2] sm:$0x1]
      %vm177 = vcmask 1040384
      %v178 = vsel %vm177, %v176, 0.0
      %179 = vadd.xlane.f32.xlu0 %v178
      %v180 = vpop.xlane.xlu0 %179
      %v181 = vrot.slane %v180, 4
      %v182 = vadd.f32 %v180, %v181
      %v183 = vrot.slane %v182, 2
      %v184 = vadd.f32 %v182, %v183
      %v185 = vrot.slane %v184, 1
      %v186 = vadd.f32 %v184, %v185
      %s187 = vtos %v186
      %v188 = vstv %s187
      %v189 = vld [vmem:[%s2] sm:$0xff]
      %v190 = vld [vmem:[%s2 + $0x8] sm:$0xff]
      %v191 = vld [vmem:[%s2 + $0x10] sm:$0xff]
      %v192 = vld [vmem:[%s2 + $0x18] sm:$0xff]
      %v193 = vmul.f32 %v23, %v189
      %v194 = vmul.f32 %v24, %v190
      %v195 = vmul.f32 %v25, %v191
      %v196 = vmul.f32 %v26, %v192
      %vm197 = vcmask 7168
      %v198 = vsel %vm197, %v193, 0.0
      %v199 = vsel %vm197, %v194, 0.0
      %v200 = vadd.f32 %v198, %v199
      %v201 = vsel %vm197, %v195, 0.0
      %v202 = vadd.f32 %v200, %v201
      %v203 = vsel %vm197, %v196, 0.0
      %v204 = vadd.f32 %v202, %v203
      %205 = vadd.xlane.f32.xlu0 %v204
      %v206 = vpop.xlane.xlu0 %205
      %v207 = vrot.slane %v206, 4
      %v208 = vadd.f32 %v206, %v207
      %v209 = vrot.slane %v208, 2
      %v210 = vadd.f32 %v208, %v209
      %v211 = vrot.slane %v210, 1
      %v212 = vadd.f32 %v210, %v211
      %s213 = vtos %v212
      %v214 = vstv %s213
      %v215 = vmul.f32 %v23, %v23
      %v216 = vmul.f32 %v24, %v24
      %v217 = vmul.f32 %v25, %v25
      %v218 = vmul.f32 %v26, %v26
      %v219 = vsel %vm197, %v215, 0.0
      %v220 = vsel %vm197, %v216, 0.0
      %v221 = vadd.f32 %v219, %v220
      %v222 = vsel %vm197, %v217, 0.0
      %v223 = vadd.f32 %v221, %v222
      %v224 = vsel %vm197, %v218, 0.0
      %v225 = vadd.f32 %v223, %v224
      %226 = vadd.xlane.f32.xlu0 %v225
      %v227 = vpop.xlane.xlu0 %226
      %v228 = vrot.slane %v227, 4
      %v229 = vadd.f32 %v227, %v228
      %v230 = vrot.slane %v229, 2
      %v231 = vadd.f32 %v229, %v230
      %v232 = vrot.slane %v231, 1
      %v233 = vadd.f32 %v231, %v232
      %s234 = vtos %v233
      %v235 = vstv %s234
      %v236 = vmul.f32 %v189, %v189
      %v237 = vmul.f32 %v190, %v190
      %v238 = vmul.f32 %v191, %v191
      %v239 = vmul.f32 %v192, %v192
      %v240 = vsel %vm197, %v236, 0.0
      %v241 = vsel %vm197, %v237, 0.0
      %v242 = vadd.f32 %v240, %v241
      %v243 = vsel %vm197, %v238, 0.0
      %v244 = vadd.f32 %v242, %v243
      %v245 = vsel %vm197, %v239, 0.0
      %v246 = vadd.f32 %v244, %v245
      %247 = vadd.xlane.f32.xlu0 %v246
      %v248 = vpop.xlane.xlu0 %247
      %v249 = vrot.slane %v248, 4
      %v250 = vadd.f32 %v248, %v249
      %v251 = vrot.slane %v250, 2
      %v252 = vadd.f32 %v250, %v251
      %v253 = vrot.slane %v252, 1
      %v254 = vadd.f32 %v252, %v253
      %s255 = vtos %v254
      %v256 = vstv %s255
      %v257 = vmul.f32 %v235, %v256
      %v258 = vmax.f32 %v257, 1e-12
      %v259 = vrsqrt.pop %v258
      %v260 = vmul.f32 %v259, %v258
      %v261 = vmul.f32 %v260, %v259
      %v262 = vmul.f32 0.5, %v261
      %v263 = vsub.f32 1.5, %v262
      %v264 = vmul.f32 %v259, %v263
      %vm265 = vweird.f32 %v258
      %vm266 = vweird.f32 %v259
      %vm267 = vmor %vm265, %vm266
      %v268 = vsel %vm267, %v259, %v264
      %v269 = vmul.f32 %v214, %v268
      %v270 = vsub.f32 %v269, 0.9
      %v271 = vmax.f32 %v270, 0.0
      %v272 = vadd.f32 %v188, %v271
      %vm273 = vcmask 0
      %274 = vst.msk [vmem:[#allocation3] sm:$0x1] %vm273, %v272
    $region25: #{tpu_custom_call.1} parent=1 // pred_fallthru
      _
    // Predicated region
    $region26: #{tpu_custom_call.1} parent=1 // pred_check
      _
    $region27: #{tpu_custom_call.1} parent=1 // pred_check_branch
      %276 = sbr.rel (0) target = $region29
    $region28: #{tpu_custom_call.1} parent=1 // pred_region
      %278 = vsyncadd [#allocation4], 0
      %s280 = sshll.u32 [#allocation3], 4
      %s281 = int_to_ptr.vmem [resolvable:$true] %s280
      %s282 = sshll.u32 %s4, 4
      %s283 = int_to_ptr.hbm [resolvable:$true] %s282
      %285 = dma.vmem_to_hbm [thread:$0]  %s281, 16, %s283, [#allocation4]
    $region29: #{tpu_custom_call.1} parent=1 // pred_fallthru
      _
    // Predicated region
    $region30: #{tpu_custom_call.1} parent=1 // pred_check
      _
    $region31: #{tpu_custom_call.1} parent=1 // pred_check_branch
      %287 = sbr.rel (0) target = $region33
    $region32: #{tpu_custom_call.1} parent=1 // pred_region
      %289 = dma.done [#allocation4], 16
    $region33: #{tpu_custom_call.1} parent=1 // pred_fallthru
      _
    %290 = vsyncpa [#allocation4], 1

</llo_original>
